<compile_context>
chip_gen: v5e
topology: v5e:2x2
jax: 0.10.0
libtpu: 0.0.40
codegen_flags: <defaults>
</compile_context>

<pallas_src>
import jax
import jax.numpy as jnp
from jax.experimental import pallas as pl
from jax.experimental.pallas import tpu as pltpu

_LANE = 128            # lane width of every packed activation row
_P = 4                 # batch samples lane-packed per kernel row
_S = _LANE // _P       # 32-lane shard per sample
_N_MM = 8              # fused micro-matmul count (8 weight slots, 8 bias rows)


def _cdiv(a, b):
    return -(-a // b)


def _round_up(v, m):
    return _cdiv(v, m) * m


# ---------------------------------------------------------------------------
# Pallas kernel: whole forward chain on a VMEM-resident bf16 weight slab.
# ---------------------------------------------------------------------------
def _frac_ae_surv_kernel(x_ref, w_ref, b_ref, out_ref):
    f32 = jnp.float32

    def mm(h, l):
        # MXU matmul against weight slot l; cast activations to the weight dtype
        # (bf16) so the native MXU datapath is used; accumulate in f32.
        k = h.shape[-1]
        w = w_ref[l] if k == _LANE else w_ref[l, :k, :]
        return jnp.dot(h.astype(w_ref.dtype), w, preferred_element_type=f32)

    b = b_ref[...]                                   # (8, 128) f32 bias rows

    x = x_ref[...]                                   # (tm, 4*in_dim) f32
    h0 = jnp.maximum(mm(x, 0) + b[0:1], 0.0)         # encoder L1 + ReLU
    h1 = jnp.maximum(mm(h0, 1) + b[1:2], 0.0)        # encoder L2 + ReLU
    z = mm(h1, 2) + b[2:3]                           # encoder L3 -> latent (no act)
    d1 = jnp.maximum(mm(z, 3) + b[3:4], 0.0)         # decoder L1 + ReLU
    s1 = jnp.maximum(mm(z, 4) + b[4:5], 0.0)         # survnet L1 + ReLU
    d2 = jnp.maximum(mm(d1, 5) + b[5:6], 0.0)        # decoder L2 + ReLU
    # decoder L3 and survnet L2 (+folded BN) write disjoint lanes of each 32-lane
    # shard ([decoded | phi]), so one sum + one ReLU finishes both branches exactly.
    pre = mm(d2, 6) + b[6:7] + mm(s1, 7) + b[7:8]
    out_ref[...] = jnp.maximum(pre, 0.0).astype(out_ref.dtype)


# ---------------------------------------------------------------------------
# Wrapper
# ---------------------------------------------------------------------------
def frac_ae_surv_forward(x, packed_w, packed_b, *, phi_dim, dec_dim, tile_rows=1024):
    """Returns (phi, decoded), matching FracAESurv.forward (eval mode)."""
    n, in_dim = x.shape
    assert _P * in_dim <= _LANE, "input feature dim too wide for 4-way lane packing"
    assert dec_dim + phi_dim <= _S

    # --- packed-row tiling -------------------------------------------------
    m = _cdiv(n, _P)                      # packed rows of real work
    steps = max(1, _cdiv(m, tile_rows))   # big tiles: per-step overhead amortized
    if steps == 1 and m > 8:
        steps = 2                         # v7x megacore: give both TCs a block
    tm = max(8, _round_up(_cdiv(m, steps), 8))
    m_pad = tm * steps                    # padding <= ~8 rows per grid step
    n_pad = m_pad * _P

    if n_pad != n:
        x = jnp.pad(x, ((0, n_pad - n), (0, 0)))
    xp = x.reshape(m_pad, _P * in_dim)    # contiguous reshape: 4 samples per row

    flops = 2 * m_pad * _LANE * (_P * in_dim + (_N_MM - 1) * _LANE)
    bytes_accessed = (int(xp.size) * 4 + m_pad * _LANE * 4
                      + int(packed_w.size) * packed_w.dtype.itemsize
                      + int(packed_b.size) * 4)

    out = pl.pallas_call(
        _frac_ae_surv_kernel,
        out_shape=jax.ShapeDtypeStruct((m_pad, _LANE), jnp.float32),
        grid_spec=pltpu.PrefetchScalarGridSpec(
            num_scalar_prefetch=0,
            grid=(steps,),
            in_specs=[
                pl.BlockSpec((tm, _P * in_dim), lambda i: (i, 0)),
                # Constant index_maps: params stay VMEM-resident across steps.
                pl.BlockSpec((_N_MM, _LANE, _LANE), lambda i: (0, 0, 0)),
                pl.BlockSpec((_N_MM, _LANE), lambda i: (0, 0)),
            ],
            out_specs=pl.BlockSpec((tm, _LANE), lambda i: (i, 0)),
        ),
        compiler_params=pltpu.CompilerParams(
            dimension_semantics=("parallel",),
        ),
        cost_estimate=pl.CostEstimate(
            flops=flops, transcendentals=0, bytes_accessed=bytes_accessed),
    )(xp, packed_w, packed_b)

    # (m_pad, 128) -> (4*m_pad, 32): row 4i+s = shard s of packed row i.
    out32 = out.reshape(n_pad, _S)
    decoded = out32[:n, :dec_dim]
    phi = out32[:n, dec_dim:dec_dim + phi_dim]
    return phi, decoded


# ---------------------------------------------------------------------------
# Parameter packing: fold BN, 4x block-diagonal replicate, pad into the slab.
# Done once at parameter-prep time (params are static at inference).
# ---------------------------------------------------------------------------
def pack_params(p, eps=1e-5, param_dtype=jnp.bfloat16):
    # Fold eval-mode BatchNorm1d into the last survnet Linear.
    scale = p["bn_g"] * jax.lax.rsqrt(p["bn_var"] + eps)          # (1, surv[-1])
    ws2f = p["ws2"] * scale                                       # column-wise
    bs2f = (p["bs2"] - p["bn_mu"]) * scale + p["bn_b"]

    in_dim = p["we1"].shape[0]
    dec_out = p["wd3"].shape[1]
    phi_out = ws2f.shape[1]
    assert _P * in_dim <= _LANE, "input dim too wide for 4-way lane packing"
    assert dec_out + phi_out <= _S, "decoded+phi must fit one 32-lane shard"

    # (weight, bias, row stride of the input shards, output col offset in shard)
    layers = [
        (p["we1"], p["be1"], in_dim, 0),     # 0: encoder L1  (x packed at stride in_dim)
        (p["we2"], p["be2"], _S, 0),         # 1: encoder L2
        (p["we3"], p["be3"], _S, 0),         # 2: encoder L3 -> latent
        (p["wd1"], p["bd1"], _S, 0),         # 3: decoder L1
        (p["ws1"], p["bs1"], _S, 0),         # 4: survnet L1
        (p["wd2"], p["bd2"], _S, 0),         # 5: decoder L2
        (p["wd3"], p["bd3"], _S, 0),         # 6: decoder L3 -> decoded (lanes [0,16) of shard)
        (ws2f,     bs2f,     _S, dec_out),   # 7: survnet L2+BN -> phi (lanes [16,32) of shard)
    ]

    w_slab = jnp.zeros((_N_MM, _LANE, _LANE), jnp.float32)
    b_slab = jnp.zeros((_N_MM, _LANE), jnp.float32)
    for l, (w, b, stride, off) in enumerate(layers):
        ki, ko = w.shape
        assert ki <= stride and off + ko <= _S, f"layer {l} does not fit a shard"
        for s in range(_P):   # replicate 4x along the block diagonal
            w_slab = w_slab.at[l,
                               s * stride:s * stride + ki,
                               s * _S + off:s * _S + off + ko].set(w)
            b_slab = b_slab.at[l,
                               s * _S + off:s * _S + off + ko].set(b.reshape(-1))
    return w_slab.astype(param_dtype), b_slab


# ---------------------------------------------------------------------------
# Deterministic parameter construction (mirrors the module's __init__ shapes).
# PyTorch nn.Linear weights (out,in) are stored transposed as (in,out).
# ---------------------------------------------------------------------------
def init_params(key, config):
    enc = config["encoder_dims"]        # [16, 32, 32]
    dec = config["decoder_dims"]        # [32, 32, 16]
    surv = config["survnet_dims"]       # [32, 16]
    latent = config["latent_feature"]   # 8

    def linear(k, fan_in, fan_out):
        kw, kb = jax.random.split(k)
        bound = 1.0 / jnp.sqrt(jnp.float32(fan_in))
        w = jax.random.uniform(kw, (fan_in, fan_out), jnp.float32, -bound, bound)
        b = jax.random.uniform(kb, (1, fan_out), jnp.float32, -bound, bound)
        return w, b

    keys = jax.random.split(key, 12)
    p = {}
    p["we1"], p["be1"] = linear(keys[0], enc[0], enc[1])
    p["we2"], p["be2"] = linear(keys[1], enc[1], enc[2])
    p["we3"], p["be3"] = linear(keys[2], enc[2], latent)
    p["wd1"], p["bd1"] = linear(keys[3], latent, dec[0])
    p["wd2"], p["bd2"] = linear(keys[4], dec[0], dec[1])
    p["wd3"], p["bd3"] = linear(keys[5], dec[1], dec[2])
    p["ws1"], p["bs1"] = linear(keys[6], latent, surv[0])
    p["ws2"], p["bs2"] = linear(keys[7], surv[0], surv[1])
    p["bn_g"] = jax.random.uniform(keys[8], (1, surv[1]), jnp.float32, 0.5, 1.5)
    p["bn_b"] = jax.random.uniform(keys[9], (1, surv[1]), jnp.float32, -0.5, 0.5)
    p["bn_mu"] = jax.random.uniform(keys[10], (1, surv[1]), jnp.float32, -0.2, 0.2)
    p["bn_var"] = jax.random.uniform(keys[11], (1, surv[1]), jnp.float32, 0.5, 1.5)
    return p


# Pure-JAX f32 reference (unfused, unfolded) for correctness checking.
def reference_forward(x, p):
    relu = lambda h: jnp.maximum(h, 0.0)
    lin = lambda h, w, b: h @ w + b
    h = relu(lin(x, p["we1"], p["be1"]))
    h = relu(lin(h, p["we2"], p["be2"]))
    z = lin(h, p["we3"], p["be3"])
    d = relu(lin(z, p["wd1"], p["bd1"]))
    d = relu(lin(d, p["wd2"], p["bd2"]))
    d = relu(lin(d, p["wd3"], p["bd3"]))
    s = relu(lin(z, p["ws1"], p["bs1"]))
    # Dropout -> identity in eval mode.
    # TODO(synk): training-mode stochastic dropout / batch-stat BN not implemented.
    s = lin(s, p["ws2"], p["bs2"])
    s = (s - p["bn_mu"]) * jax.lax.rsqrt(p["bn_var"] + 1e-5) * p["bn_g"] + p["bn_b"]
    return relu(s), d


if __name__ == "__main__":
    config = {
        "latent_feature": 8,
        "encoder_dims": [16, 32, 32],
        "decoder_dims": [32, 32, 16],   # decoder_dims[-1] == encoder_dims[0]
        "survnet_dims": [32, 16],
        "encoder_activation": "ReLU",
        "decoder_activation": "ReLU",
        "survnet_activation": "ReLU",
        "dropout": 0.1,                 # identity at inference
        "batch_norm": True,
    }

    key = jax.random.PRNGKey(0)
    kx, kp = jax.random.split(key)
    params = init_params(kp, config)
    pw, pb = pack_params(params)        # one-time prep: fold BN, replicate, pack

    phi_dim = config["survnet_dims"][-1]
    dec_dim = config["decoder_dims"][-1]
    # bf16 weight slab + bf16 MXU inputs -> relaxed tolerance vs. the f32 reference.
    TOL = dict(atol=5e-2, rtol=5e-2)

    # Small canonical batch.
    x = jax.random.normal(kx, (8, config["encoder_dims"][0]), jnp.float32)
    phi, decoded = frac_ae_surv_forward(x, pw, pb, phi_dim=phi_dim, dec_dim=dec_dim)
    jax.block_until_ready((phi, decoded))
    phi_ref, dec_ref = reference_forward(x, params)
    assert phi.shape == (8, phi_dim)
    assert decoded.shape == (8, dec_dim)
    assert jnp.allclose(phi, phi_ref, **TOL)
    assert jnp.allclose(decoded, dec_ref, **TOL)

    # Larger non-multiple-of-tile batch: exercises packing padding + the >=2-step
    # ("parallel" / megacore) grid path.
    x2 = jax.random.normal(jax.random.PRNGKey(1), (300, config["encoder_dims"][0]),
                           jnp.float32)
    phi2, decoded2 = frac_ae_surv_forward(x2, pw, pb, phi_dim=phi_dim, dec_dim=dec_dim)
    jax.block_until_ready((phi2, decoded2))
    phi2_ref, dec2_ref = reference_forward(x2, params)
    assert phi2.shape == (300, phi_dim)
    assert decoded2.shape == (300, dec_dim)
    assert jnp.allclose(phi2, phi2_ref, **TOL)
    assert jnp.allclose(decoded2, dec2_ref, **TOL)

    print("KERNEL_OK")
</pallas_src>

<mosaic_0001>
module attributes {stable_mosaic.version = 11 : i64} {
  func.func @_frac_ae_surv_kernel(%arg0: i32, %arg1: memref<8x64xf32, #tpu.memory_space<vmem>>, %arg2: memref<8x128x128xbf16, #tpu.memory_space<vmem>>, %arg3: memref<8x128xf32, #tpu.memory_space<vmem>>, %arg4: memref<8x128xf32, #tpu.memory_space<vmem>>) attributes {dimension_semantics = [#tpu.dimension_semantics<parallel>], iteration_bounds = array<i64: 1>, scalar_prefetch = 0 : i64, scratch_operands = 0 : i64, tpu.core_type = #tpu.core_type<tc>, window_params = [{transform_indices = @transform_0, window_bounds = array<i64: 8, 64>}, {pipeline_mode = #tpu.pipeline_mode<synchronous>, transform_indices = @transform_1, window_bounds = array<i64: 8, 128, 128>}, {pipeline_mode = #tpu.pipeline_mode<synchronous>, transform_indices = @transform_2, window_bounds = array<i64: 8, 128>}, {transform_indices = @transform_3, window_bounds = array<i64: 8, 128>}]} {
    %c0 = arith.constant 0 : index
    %c0_0 = arith.constant 0 : index
    %0 = vector.load %arg3[%c0, %c0_0] : memref<8x128xf32, #tpu.memory_space<vmem>>, vector<8x128xf32>
    %c0_1 = arith.constant 0 : index
    %c0_2 = arith.constant 0 : index
    %1 = vector.load %arg1[%c0_1, %c0_2] : memref<8x64xf32, #tpu.memory_space<vmem>>, vector<8x64xf32>
    %c0_3 = arith.constant 0 : index
    %c0_4 = arith.constant 0 : index
    %c0_5 = arith.constant 0 : index
    %2 = vector.load %arg2[%c0_3, %c0_4, %c0_5] : memref<8x128x128xbf16, #tpu.memory_space<vmem>>, vector<1x64x128xbf16>
    %3 = vector.shape_cast %2 : vector<1x64x128xbf16> to vector<64x128xbf16>
    %4 = arith.truncf %1 : vector<8x64xf32> to vector<8x64xbf16>
    %cst = arith.constant dense<0.000000e+00> : vector<8x128xf32>
    %5 = tpu.matmul %4, %3, %cst {dimension_numbers = #tpu.dot_dimension_numbers<[1], [0], [0], [1], [0, 0, 1, 1], [], []>} : vector<8x64xbf16>, vector<64x128xbf16>, vector<8x128xf32> -> vector<8x128xf32>
    %6 = vector.extract_strided_slice %0 {offsets = [0, 0], sizes = [1, 128], strides = [1, 1]} : vector<8x128xf32> to vector<1x128xf32>
    %7 = vector.broadcast %6 : vector<1x128xf32> to vector<8x128xf32>
    %8 = arith.addf %5, %7 : vector<8x128xf32>
    %cst_6 = arith.constant 0.000000e+00 : f32
    %9 = vector.broadcast %cst_6 : f32 to vector<8x128xf32>
    %10 = arith.maximumf %8, %9 : vector<8x128xf32>
    %c1 = arith.constant 1 : index
    %c0_7 = arith.constant 0 : index
    %c0_8 = arith.constant 0 : index
    %11 = vector.load %arg2[%c1, %c0_7, %c0_8] : memref<8x128x128xbf16, #tpu.memory_space<vmem>>, vector<1x128x128xbf16>
    %12 = vector.shape_cast %11 : vector<1x128x128xbf16> to vector<128x128xbf16>
    %13 = arith.truncf %10 : vector<8x128xf32> to vector<8x128xbf16>
    %cst_9 = arith.constant dense<0.000000e+00> : vector<8x128xf32>
    %14 = tpu.matmul %13, %12, %cst_9 {dimension_numbers = #tpu.dot_dimension_numbers<[1], [0], [0], [1], [0, 0, 1, 1], [], []>} : vector<8x128xbf16>, vector<128x128xbf16>, vector<8x128xf32> -> vector<8x128xf32>
    %15 = vector.extract_strided_slice %0 {offsets = [1, 0], sizes = [1, 128], strides = [1, 1]} : vector<8x128xf32> to vector<1x128xf32>
    %16 = vector.broadcast %15 : vector<1x128xf32> to vector<8x128xf32>
    %17 = arith.addf %14, %16 : vector<8x128xf32>
    %cst_10 = arith.constant 0.000000e+00 : f32
    %18 = vector.broadcast %cst_10 : f32 to vector<8x128xf32>
    %19 = arith.maximumf %17, %18 : vector<8x128xf32>
    %c2 = arith.constant 2 : index
    %c0_11 = arith.constant 0 : index
    %c0_12 = arith.constant 0 : index
    %20 = vector.load %arg2[%c2, %c0_11, %c0_12] : memref<8x128x128xbf16, #tpu.memory_space<vmem>>, vector<1x128x128xbf16>
    %21 = vector.shape_cast %20 : vector<1x128x128xbf16> to vector<128x128xbf16>
    %22 = arith.truncf %19 : vector<8x128xf32> to vector<8x128xbf16>
    %cst_13 = arith.constant dense<0.000000e+00> : vector<8x128xf32>
    %23 = tpu.matmul %22, %21, %cst_13 {dimension_numbers = #tpu.dot_dimension_numbers<[1], [0], [0], [1], [0, 0, 1, 1], [], []>} : vector<8x128xbf16>, vector<128x128xbf16>, vector<8x128xf32> -> vector<8x128xf32>
    %24 = vector.extract_strided_slice %0 {offsets = [2, 0], sizes = [1, 128], strides = [1, 1]} : vector<8x128xf32> to vector<1x128xf32>
    %25 = vector.broadcast %24 : vector<1x128xf32> to vector<8x128xf32>
    %26 = arith.addf %23, %25 : vector<8x128xf32>
    %c3 = arith.constant 3 : index
    %c0_14 = arith.constant 0 : index
    %c0_15 = arith.constant 0 : index
    %27 = vector.load %arg2[%c3, %c0_14, %c0_15] : memref<8x128x128xbf16, #tpu.memory_space<vmem>>, vector<1x128x128xbf16>
    %28 = vector.shape_cast %27 : vector<1x128x128xbf16> to vector<128x128xbf16>
    %29 = arith.truncf %26 : vector<8x128xf32> to vector<8x128xbf16>
    %cst_16 = arith.constant dense<0.000000e+00> : vector<8x128xf32>
    %30 = tpu.matmul %29, %28, %cst_16 {dimension_numbers = #tpu.dot_dimension_numbers<[1], [0], [0], [1], [0, 0, 1, 1], [], []>} : vector<8x128xbf16>, vector<128x128xbf16>, vector<8x128xf32> -> vector<8x128xf32>
    %31 = vector.extract_strided_slice %0 {offsets = [3, 0], sizes = [1, 128], strides = [1, 1]} : vector<8x128xf32> to vector<1x128xf32>
    %32 = vector.broadcast %31 : vector<1x128xf32> to vector<8x128xf32>
    %33 = arith.addf %30, %32 : vector<8x128xf32>
    %cst_17 = arith.constant 0.000000e+00 : f32
    %34 = vector.broadcast %cst_17 : f32 to vector<8x128xf32>
    %35 = arith.maximumf %33, %34 : vector<8x128xf32>
    %c4 = arith.constant 4 : index
    %c0_18 = arith.constant 0 : index
    %c0_19 = arith.constant 0 : index
    %36 = vector.load %arg2[%c4, %c0_18, %c0_19] : memref<8x128x128xbf16, #tpu.memory_space<vmem>>, vector<1x128x128xbf16>
    %37 = vector.shape_cast %36 : vector<1x128x128xbf16> to vector<128x128xbf16>
    %38 = arith.truncf %26 : vector<8x128xf32> to vector<8x128xbf16>
    %cst_20 = arith.constant dense<0.000000e+00> : vector<8x128xf32>
    %39 = tpu.matmul %38, %37, %cst_20 {dimension_numbers = #tpu.dot_dimension_numbers<[1], [0], [0], [1], [0, 0, 1, 1], [], []>} : vector<8x128xbf16>, vector<128x128xbf16>, vector<8x128xf32> -> vector<8x128xf32>
    %40 = vector.extract_strided_slice %0 {offsets = [4, 0], sizes = [1, 128], strides = [1, 1]} : vector<8x128xf32> to vector<1x128xf32>
    %41 = vector.broadcast %40 : vector<1x128xf32> to vector<8x128xf32>
    %42 = arith.addf %39, %41 : vector<8x128xf32>
    %cst_21 = arith.constant 0.000000e+00 : f32
    %43 = vector.broadcast %cst_21 : f32 to vector<8x128xf32>
    %44 = arith.maximumf %42, %43 : vector<8x128xf32>
    %c5 = arith.constant 5 : index
    %c0_22 = arith.constant 0 : index
    %c0_23 = arith.constant 0 : index
    %45 = vector.load %arg2[%c5, %c0_22, %c0_23] : memref<8x128x128xbf16, #tpu.memory_space<vmem>>, vector<1x128x128xbf16>
    %46 = vector.shape_cast %45 : vector<1x128x128xbf16> to vector<128x128xbf16>
    %47 = arith.truncf %35 : vector<8x128xf32> to vector<8x128xbf16>
    %cst_24 = arith.constant dense<0.000000e+00> : vector<8x128xf32>
    %48 = tpu.matmul %47, %46, %cst_24 {dimension_numbers = #tpu.dot_dimension_numbers<[1], [0], [0], [1], [0, 0, 1, 1], [], []>} : vector<8x128xbf16>, vector<128x128xbf16>, vector<8x128xf32> -> vector<8x128xf32>
    %49 = vector.extract_strided_slice %0 {offsets = [5, 0], sizes = [1, 128], strides = [1, 1]} : vector<8x128xf32> to vector<1x128xf32>
    %50 = vector.broadcast %49 : vector<1x128xf32> to vector<8x128xf32>
    %51 = arith.addf %48, %50 : vector<8x128xf32>
    %cst_25 = arith.constant 0.000000e+00 : f32
    %52 = vector.broadcast %cst_25 : f32 to vector<8x128xf32>
    %53 = arith.maximumf %51, %52 : vector<8x128xf32>
    %c6 = arith.constant 6 : index
    %c0_26 = arith.constant 0 : index
    %c0_27 = arith.constant 0 : index
    %54 = vector.load %arg2[%c6, %c0_26, %c0_27] : memref<8x128x128xbf16, #tpu.memory_space<vmem>>, vector<1x128x128xbf16>
    %55 = vector.shape_cast %54 : vector<1x128x128xbf16> to vector<128x128xbf16>
    %56 = arith.truncf %53 : vector<8x128xf32> to vector<8x128xbf16>
    %cst_28 = arith.constant dense<0.000000e+00> : vector<8x128xf32>
    %57 = tpu.matmul %56, %55, %cst_28 {dimension_numbers = #tpu.dot_dimension_numbers<[1], [0], [0], [1], [0, 0, 1, 1], [], []>} : vector<8x128xbf16>, vector<128x128xbf16>, vector<8x128xf32> -> vector<8x128xf32>
    %58 = vector.extract_strided_slice %0 {offsets = [6, 0], sizes = [1, 128], strides = [1, 1]} : vector<8x128xf32> to vector<1x128xf32>
    %59 = vector.broadcast %58 : vector<1x128xf32> to vector<8x128xf32>
    %60 = arith.addf %57, %59 : vector<8x128xf32>
    %c7 = arith.constant 7 : index
    %c0_29 = arith.constant 0 : index
    %c0_30 = arith.constant 0 : index
    %61 = vector.load %arg2[%c7, %c0_29, %c0_30] : memref<8x128x128xbf16, #tpu.memory_space<vmem>>, vector<1x128x128xbf16>
    %62 = vector.shape_cast %61 : vector<1x128x128xbf16> to vector<128x128xbf16>
    %63 = arith.truncf %44 : vector<8x128xf32> to vector<8x128xbf16>
    %cst_31 = arith.constant dense<0.000000e+00> : vector<8x128xf32>
    %64 = tpu.matmul %63, %62, %cst_31 {dimension_numbers = #tpu.dot_dimension_numbers<[1], [0], [0], [1], [0, 0, 1, 1], [], []>} : vector<8x128xbf16>, vector<128x128xbf16>, vector<8x128xf32> -> vector<8x128xf32>
    %65 = arith.addf %60, %64 : vector<8x128xf32>
    %66 = vector.extract_strided_slice %0 {offsets = [7, 0], sizes = [1, 128], strides = [1, 1]} : vector<8x128xf32> to vector<1x128xf32>
    %67 = vector.broadcast %66 : vector<1x128xf32> to vector<8x128xf32>
    %68 = arith.addf %65, %67 : vector<8x128xf32>
    %cst_32 = arith.constant 0.000000e+00 : f32
    %69 = vector.broadcast %cst_32 : f32 to vector<8x128xf32>
    %70 = arith.maximumf %68, %69 : vector<8x128xf32>
    %c0_33 = arith.constant 0 : index
    %c0_34 = arith.constant 0 : index
    %71 = vector.load %arg4[%c0_33, %c0_34] : memref<8x128xf32, #tpu.memory_space<vmem>>, vector<8x128xf32>
    tpu.vector_store %arg4[%c0_33, %c0_34], %70 {strides = array<i32>} : memref<8x128xf32, #tpu.memory_space<vmem>>, vector<8x128xf32>,
    return
  }
  func.func @transform_0(%arg0: i32) -> (i32, i32) {
    %c0_i32 = arith.constant 0 : i32
    %c0_i32_0 = arith.constant 0 : i32
    return %arg0, %c0_i32 : i32, i32
  }
  func.func @transform_1(%arg0: i32) -> (i32, i32, i32) {
    %c0_i32 = arith.constant 0 : i32
    %c0_i32_0 = arith.constant 0 : i32
    %c0_i32_1 = arith.constant 0 : i32
    %c0_i32_2 = arith.constant 0 : i32
    return %c0_i32, %c0_i32_0, %c0_i32_1 : i32, i32, i32
  }
  func.func @transform_2(%arg0: i32) -> (i32, i32) {
    %c0_i32 = arith.constant 0 : i32
    %c0_i32_0 = arith.constant 0 : i32
    %c0_i32_1 = arith.constant 0 : i32
    return %c0_i32, %c0_i32_0 : i32, i32
  }
  func.func @transform_3(%arg0: i32) -> (i32, i32) {
    %c0_i32 = arith.constant 0 : i32
    %c0_i32_0 = arith.constant 0 : i32
    return %arg0, %c0_i32 : i32, i32
  }
}

</mosaic_0001>

<llo_original>
// kernel: tpu_custom_call.1
$region0: #{tpu_custom_call.1}
  #allocation0 [shape = 'u32[]', space=smem, size = 0x4, offset = 0x4, fixed_abs, tag = 'smem constant byte address 0x4 - core index']
  #allocation1 [shape = 'u32[72,128]{1,0:T(1,128)}', space=vmem, size = 0x9000, scoped, tag = 'internal scratch']
  %s0 = inlined_call_operand.hbm [shape: f32[8,64], index: 0, kind: input, shape index: {}]
  %s1 = inlined_call_operand.hbm [shape: bf16[8,128,128], index: 1, kind: input, shape index: {}]
  %s2 = inlined_call_operand.hbm [shape: f32[8,128], index: 2, kind: input, shape index: {}]
  %s3 = inlined_call_operand.hbm [shape: f32[8,128], index: 3, kind: output, shape index: {}]
  %s4 = sld [smem:[#allocation0]]
  $region34: #{tpu_custom_call.1} parent=0
    _
  %s6 = ssub.s32 1, %s4
  %s7 = scalar_select 0, %s6, %s4
  $region1: #{tpu_custom_call.1} parent=0
    #allocation2 [shape = 'u8[4096]{0}', space=vmem, size = 0x1000, scoped, tag = 'input window, operand 0, single buffered']
    #allocation3 [shape = 's32[1]{0}', space=sflag, size = 0x4, scoped, tag = 'scoped memory for tpu_custom_call.1']
    #allocation4 [shape = 's32[1]{0}', space=sflag, size = 0x4, scoped, tag = 'scoped memory for tpu_custom_call.1']
    #allocation5 [shape = 'u8[262144]{0}', space=vmem, size = 0x40000, scoped, tag = 'input window, operand 1, single buffered']
    #allocation6 [shape = 's32[1]{0}', space=sflag, size = 0x4, scoped, tag = 'scoped memory for tpu_custom_call.1']
    #allocation7 [shape = 'u8[4096]{0}', space=vmem, size = 0x1000, scoped, tag = 'input window, operand 2, single buffered']
    #allocation8 [shape = 'u8[4096]{0}', space=vmem, size = 0x1000, scoped, tag = 'output window, operand 0, single buffered']
    %8 = vsyncpa [#allocation3], 0
    %9 = vsyncpa [#allocation6], 0
    %10 = vsyncpa [#allocation4], 0
    // Predicated region
    $region2: #{tpu_custom_call.1} parent=1 // pred_check
      _
    $region3: #{tpu_custom_call.1} parent=1 // pred_check_branch
      %12 = sbr.rel (0) target = $region5
    $region4: #{tpu_custom_call.1} parent=1 // pred_region
      %14 = vsyncadd [#allocation3], 0
      %s16 = sshll.u32 %s0, 4
      %s17 = int_to_ptr.hbm [resolvable:$true] %s16
      %s18 = sshll.u32 [#allocation2], 4
      %s19 = int_to_ptr.vmem [resolvable:$true] %s18
      %21 = dma.hbm_to_vmem [thread:$0]  %s17, 128, %s19, [#allocation3]
    $region5: #{tpu_custom_call.1} parent=1 // pred_fallthru
      _
    // Predicated region
    $region6: #{tpu_custom_call.1} parent=1 // pred_check
      _
    $region7: #{tpu_custom_call.1} parent=1 // pred_check_branch
      %23 = sbr.rel (0) target = $region9
    $region8: #{tpu_custom_call.1} parent=1 // pred_region
      %25 = vsyncadd [#allocation6], 0
      %s26 = sshll.u32 %s1, 4
      %s27 = int_to_ptr.hbm [resolvable:$true] %s26
      %s28 = sshll.u32 [#allocation5], 4
      %s29 = int_to_ptr.vmem [resolvable:$true] %s28
      %34 = dma.hbm_to_vmem [thread:$0]  %s27, 8192, %s29, [#allocation6], 64, 64, 4
    $region9: #{tpu_custom_call.1} parent=1 // pred_fallthru
      _
    // Predicated region
    $region10: #{tpu_custom_call.1} parent=1 // pred_check
      _
    $region11: #{tpu_custom_call.1} parent=1 // pred_check_branch
      %36 = sbr.rel (0) target = $region13
    $region12: #{tpu_custom_call.1} parent=1 // pred_region
      %38 = vsyncadd [#allocation6], 0
      %s40 = sshll.u32 %s2, 4
      %s41 = int_to_ptr.hbm [resolvable:$true] %s40
      %s42 = sshll.u32 [#allocation7], 4
      %s43 = int_to_ptr.vmem [resolvable:$true] %s42
      %45 = dma.hbm_to_vmem [thread:$0]  %s41, 128, %s43, [#allocation6]
    $region13: #{tpu_custom_call.1} parent=1 // pred_fallthru
      _
    // Predicated region
    $region14: #{tpu_custom_call.1} parent=1 // pred_check
      _
    $region15: #{tpu_custom_call.1} parent=1 // pred_check_branch
      %47 = sbr.rel (0) target = $region17
    $region16: #{tpu_custom_call.1} parent=1 // pred_region
      %49 = dma.done [#allocation3], 128
    $region17: #{tpu_custom_call.1} parent=1 // pred_fallthru
      _
    // Predicated region
    $region18: #{tpu_custom_call.1} parent=1 // pred_check
      _
    $region19: #{tpu_custom_call.1} parent=1 // pred_check_branch
      %51 = sbr.rel (0) target = $region21
    $region20: #{tpu_custom_call.1} parent=1 // pred_region
      %53 = dma.done [#allocation6], 8192
    $region21: #{tpu_custom_call.1} parent=1 // pred_fallthru
      _
    // Predicated region
    $region22: #{tpu_custom_call.1} parent=1 // pred_check
      _
    $region23: #{tpu_custom_call.1} parent=1 // pred_check_branch
      %55 = sbr.rel (0) target = $region25
    $region24: #{tpu_custom_call.1} parent=1 // pred_region
      %57 = dma.done [#allocation6], 128
    $region25: #{tpu_custom_call.1} parent=1 // pred_fallthru
      _
    %v59 = vld [vmem:[#allocation7] sm:$0xff]
    %v60 = vld [vmem:[#allocation2] sm:$0xff]
    %v61 = vld [vmem:[#allocation5] sm:$0xf]
    %v62 = vld [vmem:[#allocation5 + $0x4] sm:$0xf]
    %v63 = vld [vmem:[#allocation5 + $0x8] sm:$0xf]
    %v64 = vld [vmem:[#allocation5 + $0xc] sm:$0xf]
    %v65 = vld [vmem:[#allocation5 + $0x10] sm:$0xf]
    %v66 = vld [vmem:[#allocation5 + $0x14] sm:$0xf]
    %v67 = vld [vmem:[#allocation5 + $0x18] sm:$0xf]
    %v68 = vld [vmem:[#allocation5 + $0x1c] sm:$0xf]
    %v69 = vpack.c.bf16 %v60, %v60
    %v70 = vperm.slane %v59, 0
    %v79 = vunpack.c.l.b16 %v61
    %v80 = vunpack.c.l.b16 %v62
    %v81 = vunpack.c.l.b16 %v63
    %v82 = vunpack.c.l.b16 %v64
    %v83 = vunpack.c.l.b16 %v65
    %v84 = vunpack.c.l.b16 %v66
    %v85 = vunpack.c.l.b16 %v67
    %v86 = vunpack.c.l.b16 %v68
    %v87 = vpack.c.b16 %v80, %v79
    %v88 = vpack.c.b16 %v82, %v81
    %v89 = vpack.c.b16 %v84, %v83
    %v90 = vpack.c.b16 %v86, %v85
    %vm95 = vcmask 523264
    %v97 = vsel %vm95, %v69, 0
    %99 = vmatpush.bf16.msra.mxu0 0
    %100 = vmatpush.bf16.msra.mxu0 0
    %101 = vmatpush.bf16.msra.mxu0 0
    %102 = vmatpush.bf16.msra.mxu0 0
    %103 = vmatpush.bf16.msra.mxu0 %v90
    %104 = vmatpush.bf16.msra.mxu0 %v89
    %105 = vmatpush.bf16.msra.mxu0 %v88
    %106 = vmatpush.bf16.msra.mxu0 %v87
    %107 = vmatmul.bf16.gmra.mxu0 %v97
    %v108 = vpop.f32.mrf.mxu0
    %v109 = vadd.f32 %v70, %v108
    %v110 = vpop.f32.mrf.mxu0
    %111 = vdwg.mxu0
    %v112 = vmax.f32 %v109, 0.0
    %s113 = scalar_lea.vmem [#allocation5], 64
    %v114 = vld [vmem:[%s113] sm:$0xf]
    %v115 = vld [vmem:[%s113 + $0x4] sm:$0xf]
    %v116 = vld [vmem:[%s113 + $0x8] sm:$0xf]
    %v117 = vld [vmem:[%s113 + $0xc] sm:$0xf]
    %v118 = vld [vmem:[%s113 + $0x10] sm:$0xf]
    %v119 = vld [vmem:[%s113 + $0x14] sm:$0xf]
    %v120 = vld [vmem:[%s113 + $0x18] sm:$0xf]
    %v121 = vld [vmem:[%s113 + $0x1c] sm:$0xf]
    %v122 = vld [vmem:[%s113 + $0x20] sm:$0xf]
    %v123 = vld [vmem:[%s113 + $0x24] sm:$0xf]
    %v124 = vld [vmem:[%s113 + $0x28] sm:$0xf]
    %v125 = vld [vmem:[%s113 + $0x2c] sm:$0xf]
    %v126 = vld [vmem:[%s113 + $0x30] sm:$0xf]
    %v127 = vld [vmem:[%s113 + $0x34] sm:$0xf]
    %v128 = vld [vmem:[%s113 + $0x38] sm:$0xf]
    %v129 = vld [vmem:[%s113 + $0x3c] sm:$0xf]
    %v130 = vpack.c.bf16 %v112, %v112
    %v131 = vperm.slane %v59, 1
    %v148 = vunpack.c.l.b16 %v114
    %v149 = vunpack.c.l.b16 %v115
    %v150 = vunpack.c.l.b16 %v116
    %v151 = vunpack.c.l.b16 %v117
    %v152 = vunpack.c.l.b16 %v118
    %v153 = vunpack.c.l.b16 %v119
    %v154 = vunpack.c.l.b16 %v120
    %v155 = vunpack.c.l.b16 %v121
    %v156 = vunpack.c.l.b16 %v122
    %v157 = vunpack.c.l.b16 %v123
    %v158 = vunpack.c.l.b16 %v124
    %v159 = vunpack.c.l.b16 %v125
    %v160 = vunpack.c.l.b16 %v126
    %v161 = vunpack.c.l.b16 %v127
    %v162 = vunpack.c.l.b16 %v128
    %v163 = vunpack.c.l.b16 %v129
    %v164 = vpack.c.b16 %v149, %v148
    %v165 = vpack.c.b16 %v151, %v150
    %v166 = vpack.c.b16 %v153, %v152
    %v167 = vpack.c.b16 %v155, %v154
    %v168 = vpack.c.b16 %v157, %v156
    %v169 = vpack.c.b16 %v159, %v158
    %v170 = vpack.c.b16 %v161, %v160
    %v171 = vpack.c.b16 %v163, %v162
    %180 = vmatpush.bf16.msra.mxu0 %v171
    %181 = vmatpush.bf16.msra.mxu0 %v170
    %182 = vmatpush.bf16.msra.mxu0 %v169
    %183 = vmatpush.bf16.msra.mxu0 %v168
    %184 = vmatpush.bf16.msra.mxu0 %v167
    %185 = vmatpush.bf16.msra.mxu0 %v166
    %186 = vmatpush.bf16.msra.mxu0 %v165
    %187 = vmatpush.bf16.msra.mxu0 %v164
    %188 = vmatmul.bf16.gmra.mxu0 %v130
    %v189 = vpop.f32.mrf.mxu0
    %v190 = vadd.f32 %v131, %v189
    %v191 = vpop.f32.mrf.mxu0
    %192 = vdwg.mxu0
    %v193 = vmax.f32 %v190, 0.0
    %s194 = scalar_lea.vmem [#allocation5], 128
    %v195 = vld [vmem:[%s194] sm:$0xf]
    %v196 = vld [vmem:[%s194 + $0x4] sm:$0xf]
    %v197 = vld [vmem:[%s194 + $0x8] sm:$0xf]
    %v198 = vld [vmem:[%s194 + $0xc] sm:$0xf]
    %v199 = vld [vmem:[%s194 + $0x10] sm:$0xf]
    %v200 = vld [vmem:[%s194 + $0x14] sm:$0xf]
    %v201 = vld [vmem:[%s194 + $0x18] sm:$0xf]
    %v202 = vld [vmem:[%s194 + $0x1c] sm:$0xf]
    %v203 = vld [vmem:[%s194 + $0x20] sm:$0xf]
    %v204 = vld [vmem:[%s194 + $0x24] sm:$0xf]
    %v205 = vld [vmem:[%s194 + $0x28] sm:$0xf]
    %v206 = vld [vmem:[%s194 + $0x2c] sm:$0xf]
    %v207 = vld [vmem:[%s194 + $0x30] sm:$0xf]
    %v208 = vld [vmem:[%s194 + $0x34] sm:$0xf]
    %v209 = vld [vmem:[%s194 + $0x38] sm:$0xf]
    %v210 = vld [vmem:[%s194 + $0x3c] sm:$0xf]
    %v211 = vpack.c.bf16 %v193, %v193
    %v212 = vperm.slane %v59, 2
    %v229 = vunpack.c.l.b16 %v195
    %v230 = vunpack.c.l.b16 %v196
    %v231 = vunpack.c.l.b16 %v197
    %v232 = vunpack.c.l.b16 %v198
    %v233 = vunpack.c.l.b16 %v199
    %v234 = vunpack.c.l.b16 %v200
    %v235 = vunpack.c.l.b16 %v201
    %v236 = vunpack.c.l.b16 %v202
    %v237 = vunpack.c.l.b16 %v203
    %v238 = vunpack.c.l.b16 %v204
    %v239 = vunpack.c.l.b16 %v205
    %v240 = vunpack.c.l.b16 %v206
    %v241 = vunpack.c.l.b16 %v207
    %v242 = vunpack.c.l.b16 %v208
    %v243 = vunpack.c.l.b16 %v209
    %v244 = vunpack.c.l.b16 %v210
    %v245 = vpack.c.b16 %v230, %v229
    %v246 = vpack.c.b16 %v232, %v231
    %v247 = vpack.c.b16 %v234, %v233
    %v248 = vpack.c.b16 %v236, %v235
    %v249 = vpack.c.b16 %v238, %v237
    %v250 = vpack.c.b16 %v240, %v239
    %v251 = vpack.c.b16 %v242, %v241
    %v252 = vpack.c.b16 %v244, %v243
    %261 = vmatpush.bf16.msra.mxu0 %v252
    %262 = vmatpush.bf16.msra.mxu0 %v251
    %263 = vmatpush.bf16.msra.mxu0 %v250
    %264 = vmatpush.bf16.msra.mxu0 %v249
    %265 = vmatpush.bf16.msra.mxu0 %v248
    %266 = vmatpush.bf16.msra.mxu0 %v247
    %267 = vmatpush.bf16.msra.mxu0 %v246
    %268 = vmatpush.bf16.msra.mxu0 %v245
    %269 = vmatmul.bf16.gmra.mxu0 %v211
    %v270 = vpop.f32.mrf.mxu0
    %v271 = vadd.f32 %v212, %v270
    %v272 = vpop.f32.mrf.mxu0
    %273 = vdwg.mxu0
    %s274 = scalar_lea.vmem [#allocation5], 192
    %v275 = vld [vmem:[%s274] sm:$0xf]
    %v276 = vld [vmem:[%s274 + $0x4] sm:$0xf]
    %v277 = vld [vmem:[%s274 + $0x8] sm:$0xf]
    %v278 = vld [vmem:[%s274 + $0xc] sm:$0xf]
    %v279 = vld [vmem:[%s274 + $0x10] sm:$0xf]
    %v280 = vld [vmem:[%s274 + $0x14] sm:$0xf]
    %v281 = vld [vmem:[%s274 + $0x18] sm:$0xf]
    %v282 = vld [vmem:[%s274 + $0x1c] sm:$0xf]
    %v283 = vld [vmem:[%s274 + $0x20] sm:$0xf]
    %v284 = vld [vmem:[%s274 + $0x24] sm:$0xf]
    %v285 = vld [vmem:[%s274 + $0x28] sm:$0xf]
    %v286 = vld [vmem:[%s274 + $0x2c] sm:$0xf]
    %v287 = vld [vmem:[%s274 + $0x30] sm:$0xf]
    %v288 = vld [vmem:[%s274 + $0x34] sm:$0xf]
    %v289 = vld [vmem:[%s274 + $0x38] sm:$0xf]
    %v290 = vld [vmem:[%s274 + $0x3c] sm:$0xf]
    %v291 = vpack.c.bf16 %v271, %v271
    %v292 = vperm.slane %v59, 3
    %v309 = vunpack.c.l.b16 %v275
    %v310 = vunpack.c.l.b16 %v276
    %v311 = vunpack.c.l.b16 %v277
    %v312 = vunpack.c.l.b16 %v278
    %v313 = vunpack.c.l.b16 %v279
    %v314 = vunpack.c.l.b16 %v280
    %v315 = vunpack.c.l.b16 %v281
    %v316 = vunpack.c.l.b16 %v282
    %v317 = vunpack.c.l.b16 %v283
    %v318 = vunpack.c.l.b16 %v284
    %v319 = vunpack.c.l.b16 %v285
    %v320 = vunpack.c.l.b16 %v286
    %v321 = vunpack.c.l.b16 %v287
    %v322 = vunpack.c.l.b16 %v288
    %v323 = vunpack.c.l.b16 %v289
    %v324 = vunpack.c.l.b16 %v290
    %v325 = vpack.c.b16 %v310, %v309
    %v326 = vpack.c.b16 %v312, %v311
    %v327 = vpack.c.b16 %v314, %v313
    %v328 = vpack.c.b16 %v316, %v315
    %v329 = vpack.c.b16 %v318, %v317
    %v330 = vpack.c.b16 %v320, %v319
    %v331 = vpack.c.b16 %v322, %v321
    %v332 = vpack.c.b16 %v324, %v323
    %341 = vmatpush.bf16.msra.mxu0 %v332
    %342 = vmatpush.bf16.msra.mxu0 %v331
    %343 = vmatpush.bf16.msra.mxu0 %v330
    %344 = vmatpush.bf16.msra.mxu0 %v329
    %345 = vmatpush.bf16.msra.mxu0 %v328
    %346 = vmatpush.bf16.msra.mxu0 %v327
    %347 = vmatpush.bf16.msra.mxu0 %v326
    %348 = vmatpush.bf16.msra.mxu0 %v325
    %349 = vmatmul.bf16.gmra.mxu0 %v291
    %v350 = vpop.f32.mrf.mxu0
    %v351 = vadd.f32 %v292, %v350
    %v352 = vpop.f32.mrf.mxu0
    %353 = vdwg.mxu0
    %v354 = vmax.f32 %v351, 0.0
    %s355 = scalar_lea.vmem [#allocation5], 256
    %v356 = vld [vmem:[%s355] sm:$0xf]
    %v357 = vld [vmem:[%s355 + $0x4] sm:$0xf]
    %v358 = vld [vmem:[%s355 + $0x8] sm:$0xf]
    %v359 = vld [vmem:[%s355 + $0xc] sm:$0xf]
    %v360 = vld [vmem:[%s355 + $0x10] sm:$0xf]
    %v361 = vld [vmem:[%s355 + $0x14] sm:$0xf]
    %v362 = vld [vmem:[%s355 + $0x18] sm:$0xf]
    %v363 = vld [vmem:[%s355 + $0x1c] sm:$0xf]
    %v364 = vld [vmem:[%s355 + $0x20] sm:$0xf]
    %v365 = vld [vmem:[%s355 + $0x24] sm:$0xf]
    %v366 = vld [vmem:[%s355 + $0x28] sm:$0xf]
    %v367 = vld [vmem:[%s355 + $0x2c] sm:$0xf]
    %v368 = vld [vmem:[%s355 + $0x30] sm:$0xf]
    %v369 = vld [vmem:[%s355 + $0x34] sm:$0xf]
    %v370 = vld [vmem:[%s355 + $0x38] sm:$0xf]
    %v371 = vld [vmem:[%s355 + $0x3c] sm:$0xf]
    %v372 = vperm.slane %v59, 4
    %v389 = vunpack.c.l.b16 %v356
    %v390 = vunpack.c.l.b16 %v357
    %v391 = vunpack.c.l.b16 %v358
    %v392 = vunpack.c.l.b16 %v359
    %v393 = vunpack.c.l.b16 %v360
    %v394 = vunpack.c.l.b16 %v361
    %v395 = vunpack.c.l.b16 %v362
    %v396 = vunpack.c.l.b16 %v363
    %v397 = vunpack.c.l.b16 %v364
    %v398 = vunpack.c.l.b16 %v365
    %v399 = vunpack.c.l.b16 %v366
    %v400 = vunpack.c.l.b16 %v367
    %v401 = vunpack.c.l.b16 %v368
    %v402 = vunpack.c.l.b16 %v369
    %v403 = vunpack.c.l.b16 %v370
    %v404 = vunpack.c.l.b16 %v371
    %v405 = vpack.c.b16 %v390, %v389
    %v406 = vpack.c.b16 %v392, %v391
    %v407 = vpack.c.b16 %v394, %v393
    %v408 = vpack.c.b16 %v396, %v395
    %v409 = vpack.c.b16 %v398, %v397
    %v410 = vpack.c.b16 %v400, %v399
    %v411 = vpack.c.b16 %v402, %v401
    %v412 = vpack.c.b16 %v404, %v403
    %421 = vmatpush.bf16.msra.mxu0 %v412
    %422 = vmatpush.bf16.msra.mxu0 %v411
    %423 = vmatpush.bf16.msra.mxu0 %v410
    %424 = vmatpush.bf16.msra.mxu0 %v409
    %425 = vmatpush.bf16.msra.mxu0 %v408
    %426 = vmatpush.bf16.msra.mxu0 %v407
    %427 = vmatpush.bf16.msra.mxu0 %v406
    %428 = vmatpush.bf16.msra.mxu0 %v405
    %429 = vmatmul.bf16.gmra.mxu0 %v291
    %v430 = vpop.f32.mrf.mxu0
    %v431 = vadd.f32 %v372, %v430
    %v432 = vpop.f32.mrf.mxu0
    %433 = vdwg.mxu0
    %v434 = vmax.f32 %v431, 0.0
    %s435 = scalar_lea.vmem [#allocation5], 320
    %v436 = vld [vmem:[%s435] sm:$0xf]
    %v437 = vld [vmem:[%s435 + $0x4] sm:$0xf]
    %v438 = vld [vmem:[%s435 + $0x8] sm:$0xf]
    %v439 = vld [vmem:[%s435 + $0xc] sm:$0xf]
    %v440 = vld [vmem:[%s435 + $0x10] sm:$0xf]
    %v441 = vld [vmem:[%s435 + $0x14] sm:$0xf]
    %v442 = vld [vmem:[%s435 + $0x18] sm:$0xf]
    %v443 = vld [vmem:[%s435 + $0x1c] sm:$0xf]
    %v444 = vld [vmem:[%s435 + $0x20] sm:$0xf]
    %v445 = vld [vmem:[%s435 + $0x24] sm:$0xf]
    %v446 = vld [vmem:[%s435 + $0x28] sm:$0xf]
    %v447 = vld [vmem:[%s435 + $0x2c] sm:$0xf]
    %v448 = vld [vmem:[%s435 + $0x30] sm:$0xf]
    %v449 = vld [vmem:[%s435 + $0x34] sm:$0xf]
    %v450 = vld [vmem:[%s435 + $0x38] sm:$0xf]
    %v451 = vld [vmem:[%s435 + $0x3c] sm:$0xf]
    %v452 = vpack.c.bf16 %v354, %v354
    %v453 = vperm.slane %v59, 5
    %v470 = vunpack.c.l.b16 %v436
    %v471 = vunpack.c.l.b16 %v437
    %v472 = vunpack.c.l.b16 %v438
    %v473 = vunpack.c.l.b16 %v439
    %v474 = vunpack.c.l.b16 %v440
    %v475 = vunpack.c.l.b16 %v441
    %v476 = vunpack.c.l.b16 %v442
    %v477 = vunpack.c.l.b16 %v443
    %v478 = vunpack.c.l.b16 %v444
    %v479 = vunpack.c.l.b16 %v445
    %v480 = vunpack.c.l.b16 %v446
    %v481 = vunpack.c.l.b16 %v447
    %v482 = vunpack.c.l.b16 %v448
    %v483 = vunpack.c.l.b16 %v449
    %v484 = vunpack.c.l.b16 %v450
    %v485 = vunpack.c.l.b16 %v451
    %v486 = vpack.c.b16 %v471, %v470
    %v487 = vpack.c.b16 %v473, %v472
    %v488 = vpack.c.b16 %v475, %v474
    %v489 = vpack.c.b16 %v477, %v476
    %v490 = vpack.c.b16 %v479, %v478
    %v491 = vpack.c.b16 %v481, %v480
    %v492 = vpack.c.b16 %v483, %v482
    %v493 = vpack.c.b16 %v485, %v484
    %502 = vmatpush.bf16.msra.mxu0 %v493
    %503 = vmatpush.bf16.msra.mxu0 %v492
    %504 = vmatpush.bf16.msra.mxu0 %v491
    %505 = vmatpush.bf16.msra.mxu0 %v490
    %506 = vmatpush.bf16.msra.mxu0 %v489
    %507 = vmatpush.bf16.msra.mxu0 %v488
    %508 = vmatpush.bf16.msra.mxu0 %v487
    %509 = vmatpush.bf16.msra.mxu0 %v486
    %510 = vmatmul.bf16.gmra.mxu0 %v452
    %v511 = vpop.f32.mrf.mxu0
    %v512 = vadd.f32 %v453, %v511
    %v513 = vpop.f32.mrf.mxu0
    %514 = vdwg.mxu0
    %v515 = vmax.f32 %v512, 0.0
    %s516 = scalar_lea.vmem [#allocation5], 384
    %v517 = vld [vmem:[%s516] sm:$0xf]
    %v518 = vld [vmem:[%s516 + $0x4] sm:$0xf]
    %v519 = vld [vmem:[%s516 + $0x8] sm:$0xf]
    %v520 = vld [vmem:[%s516 + $0xc] sm:$0xf]
    %v521 = vld [vmem:[%s516 + $0x10] sm:$0xf]
    %v522 = vld [vmem:[%s516 + $0x14] sm:$0xf]
    %v523 = vld [vmem:[%s516 + $0x18] sm:$0xf]
    %v524 = vld [vmem:[%s516 + $0x1c] sm:$0xf]
    %v525 = vld [vmem:[%s516 + $0x20] sm:$0xf]
    %v526 = vld [vmem:[%s516 + $0x24] sm:$0xf]
    %v527 = vld [vmem:[%s516 + $0x28] sm:$0xf]
    %v528 = vld [vmem:[%s516 + $0x2c] sm:$0xf]
    %v529 = vld [vmem:[%s516 + $0x30] sm:$0xf]
    %v530 = vld [vmem:[%s516 + $0x34] sm:$0xf]
    %v531 = vld [vmem:[%s516 + $0x38] sm:$0xf]
    %v532 = vld [vmem:[%s516 + $0x3c] sm:$0xf]
    %v533 = vpack.c.bf16 %v515, %v515
    %v534 = vperm.slane %v59, 6
    %v551 = vunpack.c.l.b16 %v517
    %v552 = vunpack.c.l.b16 %v518
    %v553 = vunpack.c.l.b16 %v519
    %v554 = vunpack.c.l.b16 %v520
    %v555 = vunpack.c.l.b16 %v521
    %v556 = vunpack.c.l.b16 %v522
    %v557 = vunpack.c.l.b16 %v523
    %v558 = vunpack.c.l.b16 %v524
    %v559 = vunpack.c.l.b16 %v525
    %v560 = vunpack.c.l.b16 %v526
    %v561 = vunpack.c.l.b16 %v527
    %v562 = vunpack.c.l.b16 %v528
    %v563 = vunpack.c.l.b16 %v529
    %v564 = vunpack.c.l.b16 %v530
    %v565 = vunpack.c.l.b16 %v531
    %v566 = vunpack.c.l.b16 %v532
    %v567 = vpack.c.b16 %v552, %v551
    %v568 = vpack.c.b16 %v554, %v553
    %v569 = vpack.c.b16 %v556, %v555
    %v570 = vpack.c.b16 %v558, %v557
    %v571 = vpack.c.b16 %v560, %v559
    %v572 = vpack.c.b16 %v562, %v561
    %v573 = vpack.c.b16 %v564, %v563
    %v574 = vpack.c.b16 %v566, %v565
    %583 = vmatpush.bf16.msra.mxu0 %v574
    %584 = vmatpush.bf16.msra.mxu0 %v573
    %585 = vmatpush.bf16.msra.mxu0 %v572
    %586 = vmatpush.bf16.msra.mxu0 %v571
    %587 = vmatpush.bf16.msra.mxu0 %v570
    %588 = vmatpush.bf16.msra.mxu0 %v569
    %589 = vmatpush.bf16.msra.mxu0 %v568
    %590 = vmatpush.bf16.msra.mxu0 %v567
    %591 = vmatmul.bf16.gmra.mxu0 %v533
    %v592 = vpop.f32.mrf.mxu0
    %v593 = vadd.f32 %v534, %v592
    %v594 = vpop.f32.mrf.mxu0
    %595 = vdwg.mxu0
    %s596 = scalar_lea.vmem [#allocation5], 448
    %v597 = vld [vmem:[%s596] sm:$0xf]
    %v598 = vld [vmem:[%s596 + $0x4] sm:$0xf]
    %v599 = vld [vmem:[%s596 + $0x8] sm:$0xf]
    %v600 = vld [vmem:[%s596 + $0xc] sm:$0xf]
    %v601 = vld [vmem:[%s596 + $0x10] sm:$0xf]
    %v602 = vld [vmem:[%s596 + $0x14] sm:$0xf]
    %v603 = vld [vmem:[%s596 + $0x18] sm:$0xf]
    %v604 = vld [vmem:[%s596 + $0x1c] sm:$0xf]
    %v605 = vld [vmem:[%s596 + $0x20] sm:$0xf]
    %v606 = vld [vmem:[%s596 + $0x24] sm:$0xf]
    %v607 = vld [vmem:[%s596 + $0x28] sm:$0xf]
    %v608 = vld [vmem:[%s596 + $0x2c] sm:$0xf]
    %v609 = vld [vmem:[%s596 + $0x30] sm:$0xf]
    %v610 = vld [vmem:[%s596 + $0x34] sm:$0xf]
    %v611 = vld [vmem:[%s596 + $0x38] sm:$0xf]
    %v612 = vld [vmem:[%s596 + $0x3c] sm:$0xf]
    %v613 = vpack.c.bf16 %v434, %v434
    %v630 = vunpack.c.l.b16 %v597
    %v631 = vunpack.c.l.b16 %v598
    %v632 = vunpack.c.l.b16 %v599
    %v633 = vunpack.c.l.b16 %v600
    %v634 = vunpack.c.l.b16 %v601
    %v635 = vunpack.c.l.b16 %v602
    %v636 = vunpack.c.l.b16 %v603
    %v637 = vunpack.c.l.b16 %v604
    %v638 = vunpack.c.l.b16 %v605
    %v639 = vunpack.c.l.b16 %v606
    %v640 = vunpack.c.l.b16 %v607
    %v641 = vunpack.c.l.b16 %v608
    %v642 = vunpack.c.l.b16 %v609
    %v643 = vunpack.c.l.b16 %v610
    %v644 = vunpack.c.l.b16 %v611
    %v645 = vunpack.c.l.b16 %v612
    %v646 = vpack.c.b16 %v631, %v630
    %v647 = vpack.c.b16 %v633, %v632
    %v648 = vpack.c.b16 %v635, %v634
    %v649 = vpack.c.b16 %v637, %v636
    %v650 = vpack.c.b16 %v639, %v638
    %v651 = vpack.c.b16 %v641, %v640
    %v652 = vpack.c.b16 %v643, %v642
    %v653 = vpack.c.b16 %v645, %v644
    %662 = vmatpush.bf16.msra.mxu0 %v653
    %663 = vmatpush.bf16.msra.mxu0 %v652
    %664 = vmatpush.bf16.msra.mxu0 %v651
    %665 = vmatpush.bf16.msra.mxu0 %v650
    %666 = vmatpush.bf16.msra.mxu0 %v649
    %667 = vmatpush.bf16.msra.mxu0 %v648
    %668 = vmatpush.bf16.msra.mxu0 %v647
    %669 = vmatpush.bf16.msra.mxu0 %v646
    %670 = vmatmul.bf16.gmra.mxu0 %v613
    %v671 = vpop.f32.mrf.mxu0
    %v672 = vadd.f32 0.0, %v671
    %v673 = vpop.f32.mrf.mxu0
    %674 = vdwg.mxu0
    %v675 = vadd.f32 %v593, %v672
    %v676 = vperm.slane %v59, 7
    %v677 = vadd.f32 %v675, %v676
    %v678 = vmax.f32 %v677, 0.0
    %679 = vst [vmem:[#allocation8] sm:$0xff] %v678
    // Predicated region
    $region26: #{tpu_custom_call.1} parent=1 // pred_check
      _
    $region27: #{tpu_custom_call.1} parent=1 // pred_check_branch
      %681 = sbr.rel (0) target = $region29
    $region28: #{tpu_custom_call.1} parent=1 // pred_region
      %683 = vsyncadd [#allocation4], 0
      %s685 = sshll.u32 [#allocation8], 4
      %s686 = int_to_ptr.vmem [resolvable:$true] %s685
      %s687 = sshll.u32 %s3, 4
      %s688 = int_to_ptr.hbm [resolvable:$true] %s687
      %690 = dma.vmem_to_hbm [thread:$0]  %s686, 128, %s688, [#allocation4]
    $region29: #{tpu_custom_call.1} parent=1 // pred_fallthru
      _
    // Predicated region
    $region30: #{tpu_custom_call.1} parent=1 // pred_check
      _
    $region31: #{tpu_custom_call.1} parent=1 // pred_check_branch
      %692 = sbr.rel (0) target = $region33
    $region32: #{tpu_custom_call.1} parent=1 // pred_region
      %694 = dma.done [#allocation4], 128
    $region33: #{tpu_custom_call.1} parent=1 // pred_fallthru
      _
    %695 = vsyncpa [#allocation3], 1
    %696 = vsyncpa [#allocation6], 1
    %697 = vsyncpa [#allocation4], 1

</llo_original>
